<compile_context>
chip_gen: v5e
topology: v5e:2x2
jax: 0.10.0
libtpu: 0.0.40
codegen_flags: <defaults>
</compile_context>

<pallas_src>
import jax
import jax.numpy as jnp
from jax import lax
from jax.experimental import pallas as pl
from jax.experimental.pallas import tpu as pltpu


# ----------------------------- Pallas kernel ------------------------------ #

def encoder_gru_kernel(tok_ref, table_ref, bgi_ref, wbd_ref, bh_ref, h0_ref,
                       out_ref, last_ref):
    T = out_ref.shape[0]
    H2 = h0_ref.shape[1]            # 2H
    H = H2 // 2
    V2 = table_ref.shape[0]         # 2V (fwd rows then bwd rows)
    V = V2 // 2

    # ---- bidirectional one-hot: row t hits tok[t] in cols [0,V) and
    #      tok[T-1-t] + V in cols [V,2V).  (out-of-range token ids silently map
    #      to a zero row, unlike torch.nn.Embedding which would raise.)
    tok = tok_ref[:, 0:1]           # (T, 1) int32, forward-time tokens
    tok_rev = tok_ref[:, 1:2]       # (T, 1) int32, time-reversed tokens
    col = lax.broadcasted_iota(jnp.int32, (T, V2), 1)
    onehot2 = jnp.logical_or(col == tok, col == tok_rev + V).astype(jnp.float32)

    # ---- front end: ONE MXU dot produces per-step input gates for both
    #      directions, already time-aligned to the interleaved recurrence.
    #      Column layout: [r_f | r_b | z_f | z_b | n_f | n_b], each H lanes.
    gi = jnp.dot(onehot2.astype(table_ref.dtype), table_ref[...],
                 preferred_element_type=jnp.float32) + bgi_ref[...]   # (T, 6H) f32

    wbd = wbd_ref[...]              # (2H, 6H) bf16, blockdiag(Wh_f, Wh_b)
    bh = bh_ref[...]                # (1, 6H)  f32

    # ---- fused fwd/bwd recurrence.  h layout: [h_f | h_b] (1, 2H) f32.
    h = h0_ref[...]
    hs = []
    for t in range(T):
        gh = jnp.dot(h.astype(wbd.dtype), wbd,
                     preferred_element_type=jnp.float32) + bh          # (1, 6H)
        gi_t = gi[t:t + 1, :]
        rz = jax.nn.sigmoid(gi_t[:, 0:4 * H] + gh[:, 0:4 * H])         # one EUP region
        r = rz[:, 0:2 * H]
        z = rz[:, 2 * H:4 * H]
        n = jnp.tanh(gi_t[:, 4 * H:] + r * gh[:, 4 * H:])
        h = (1.0 - z) * n + z * h
        hs.append(h)

    # ---- assemble outputs in registers; one lane-dense store per output.
    out_f = jnp.concatenate([hs[t][:, 0:H] for t in range(T)], axis=0)        # (T, H)
    out_b = jnp.concatenate([hs[T - 1 - t][:, H:] for t in range(T)], axis=0)  # (T, H)
    out_ref[...] = jnp.concatenate([out_f, out_b], axis=1)                    # (T, 2H)
    # last_hidden = outputs[-1]: fwd hidden at t=T-1 and bwd hidden at t=T-1
    # (computed at loop iteration 0) -- written from registers, no re-read.
    last_ref[...] = jnp.concatenate([hs[T - 1][:, 0:H], hs[0][:, H:]], axis=1)


# ------------------------------- wrapper ----------------------------------- #

def encoder_forward(tokens, hidden, packed):
    """tokens: (T,) int32; hidden: (2, 1, H) float32. Returns (outputs, last_hidden)."""
    H = hidden.shape[-1]
    T = tokens.shape[0]

    tok = tokens.astype(jnp.int32)
    tok2 = jnp.stack([tok, tok[::-1]], axis=1)                         # (T, 2)
    h0_cat = hidden.astype(jnp.float32).reshape(1, 2 * H)              # [h_f | h_b]

    out, last_hidden = pl.pallas_call(
        encoder_gru_kernel,
        out_shape=(jax.ShapeDtypeStruct((T, 2 * H), jnp.float32),
                   jax.ShapeDtypeStruct((1, 2 * H), jnp.float32)),
        in_specs=[pl.BlockSpec(memory_space=pltpu.MemorySpace.VMEM)] * 6,
        out_specs=(pl.BlockSpec(memory_space=pltpu.MemorySpace.VMEM),
                   pl.BlockSpec(memory_space=pltpu.MemorySpace.VMEM)),
    )(tok2, packed["table"], packed["bgi"], packed["wbd"], packed["bh"], h0_cat)

    outputs = out.reshape(T, 1, 2 * H)       # metadata-only reshape
    return outputs, last_hidden


# ----------------------------- param init / packing ------------------------ #

def init_params(key, input_size, hidden_size):
    """Raw PyTorch-layout parameters (f32)."""
    H = hidden_size
    k_emb, k_f, k_b = jax.random.split(key, 3)
    bound = 1.0 / (H ** 0.5)

    def init_dir(k):
        k1, k2, k3, k4 = jax.random.split(k, 4)
        w_ih = jax.random.uniform(k1, (3 * H, H), jnp.float32, -bound, bound)
        w_hh = jax.random.uniform(k2, (3 * H, H), jnp.float32, -bound, bound)
        b_ih = jax.random.uniform(k3, (3 * H,), jnp.float32, -bound, bound)
        b_hh = jax.random.uniform(k4, (3 * H,), jnp.float32, -bound, bound)
        return w_ih, w_hh, b_ih, b_hh

    wi_f, wh_f, bi_f, bh_f = init_dir(k_f)
    wi_b, wh_b, bi_b, bh_b = init_dir(k_b)
    return {
        "embedding": jax.random.normal(k_emb, (input_size, H), jnp.float32),
        "w_ih_f": wi_f, "w_hh_f": wh_f, "b_ih_f": bi_f, "b_hh_f": bh_f,
        "w_ih_b": wi_b, "w_hh_b": wh_b, "b_ih_b": bi_b, "b_hh_b": bh_b,
    }
    # NOTE: the module's `self.cat` Linear is never used in forward(), so it is omitted.


def pack_params(params):
    """Offline folding/packing for the kernel.

    Gate-major column layout [r_f | r_b | z_f | z_b | n_f | n_b] (each H wide).
    MXU operands (table, wbd) are pre-cast to bf16; biases stay f32.
    """
    emb = params["embedding"]
    V, H = emb.shape
    z = jnp.zeros((H, H), jnp.float32)

    def gate_cols(w):  # (3H, H) torch layout [W_r; W_z; W_n] -> transposed per gate
        return w[0:H].T, w[H:2 * H].T, w[2 * H:3 * H].T

    ir_f, iz_f, in_f = gate_cols(params["w_ih_f"])
    ir_b, iz_b, in_b = gate_cols(params["w_ih_b"])
    hr_f, hz_f, hn_f = gate_cols(params["w_hh_f"])
    hr_b, hz_b, hn_b = gate_cols(params["w_hh_b"])

    # fold embedding into the input projection; rows [0:V) feed the fwd time
    # index, rows [V:2V) the bwd time index (zeros in the other direction's cols).
    wi_pack_f = jnp.concatenate([ir_f, z, iz_f, z, in_f, z], axis=1)     # (H, 6H)
    wi_pack_b = jnp.concatenate([z, ir_b, z, iz_b, z, in_b], axis=1)     # (H, 6H)
    table = jnp.concatenate([emb @ wi_pack_f, emb @ wi_pack_b], axis=0)  # (2V, 6H)

    def pack_bias(bf, bb):
        return jnp.concatenate([bf[0:H], bb[0:H], bf[H:2 * H], bb[H:2 * H],
                                bf[2 * H:], bb[2 * H:]])[None, :]        # (1, 6H)

    # block-diagonal hidden weights: rows [0:H) multiply h_f, rows [H:2H) h_b.
    wbd = jnp.concatenate([
        jnp.concatenate([hr_f, z, hz_f, z, hn_f, z], axis=1),
        jnp.concatenate([z, hr_b, z, hz_b, z, hn_b], axis=1)], axis=0)   # (2H, 6H)

    return {
        "table": table.astype(jnp.bfloat16),
        "wbd": wbd.astype(jnp.bfloat16),
        "bgi": pack_bias(params["b_ih_f"], params["b_ih_b"]),
        "bh": pack_bias(params["b_hh_f"], params["b_hh_b"]),
    }


# --------------------------- pure-JAX reference ----------------------------- #

def encoder_reference(tokens, h0, params):
    """Full-f32 reference of the PyTorch module semantics. h0: (2, H)."""
    emb = jnp.take(params["embedding"], tokens, axis=0)    # (T, H)
    H = params["embedding"].shape[1]

    def run_dir(xs, h, w_ih, w_hh, b_ih, b_hh):
        def step(h, x):
            gi = x @ w_ih.T + b_ih
            gh = h @ w_hh.T + b_hh
            r = jax.nn.sigmoid(gi[0:H] + gh[0:H])
            zg = jax.nn.sigmoid(gi[H:2 * H] + gh[H:2 * H])
            n = jnp.tanh(gi[2 * H:] + r * gh[2 * H:])
            h_new = (1.0 - zg) * n + zg * h
            return h_new, h_new
        _, ys = lax.scan(step, h, xs)
        return ys

    out_f = run_dir(emb, h0[0], params["w_ih_f"], params["w_hh_f"],
                    params["b_ih_f"], params["b_hh_f"])
    out_b = run_dir(emb[::-1], h0[1], params["w_ih_b"], params["w_hh_b"],
                    params["b_ih_b"], params["b_hh_b"])[::-1]
    return jnp.concatenate([out_f, out_b], axis=-1)        # (T, 2H)


# --------------------------------- main ------------------------------------ #

if __name__ == "__main__":
    INPUT_SIZE = 50     # vocab
    HIDDEN = 32
    SEQ = 8

    key = jax.random.PRNGKey(0)
    k_params, k_tok = jax.random.split(key)
    params = init_params(k_params, INPUT_SIZE, HIDDEN)
    packed = pack_params(params)

    tokens = jax.random.randint(k_tok, (SEQ,), 0, INPUT_SIZE, dtype=jnp.int32)
    hidden0 = jnp.zeros((2, 1, HIDDEN), jnp.float32)   # Encoder.init_hidden()

    outputs, last_hidden = encoder_forward(tokens, hidden0, packed)
    outputs = jax.block_until_ready(outputs)
    last_hidden = jax.block_until_ready(last_hidden)

    # sanity check vs full-f32 pure-JAX reference (kernel uses bf16 MXU operands,
    # so tolerances are loosened accordingly).
    ref = encoder_reference(tokens, hidden0.reshape(2, HIDDEN), params)
    assert outputs.shape == (SEQ, 1, 2 * HIDDEN)
    assert last_hidden.shape == (1, 2 * HIDDEN)
    assert jnp.allclose(outputs.reshape(SEQ, 2 * HIDDEN), ref, atol=2.5e-2, rtol=2.5e-2)
    assert jnp.allclose(last_hidden, ref[-1:], atol=2.5e-2, rtol=2.5e-2)

    print("KERNEL_OK")
</pallas_src>

<mosaic_0001>
module attributes {stable_mosaic.version = 11 : i64} {
  func.func @encoder_gru_kernel(%arg0: memref<8x2xi32, #tpu.memory_space<vmem>>, %arg1: memref<100x192xbf16, #tpu.memory_space<vmem>>, %arg2: memref<1x192xf32, #tpu.memory_space<vmem>>, %arg3: memref<64x192xbf16, #tpu.memory_space<vmem>>, %arg4: memref<1x192xf32, #tpu.memory_space<vmem>>, %arg5: memref<1x64xf32, #tpu.memory_space<vmem>>, %arg6: memref<8x64xf32, #tpu.memory_space<vmem>>, %arg7: memref<1x64xf32, #tpu.memory_space<vmem>>) attributes {dimension_semantics = [], scalar_prefetch = 0 : i64, scratch_operands = 0 : i64, tpu.core_type = #tpu.core_type<tc>} {
    %c0 = arith.constant 0 : index
    %c0_0 = arith.constant 0 : index
    %0 = vector.load %arg0[%c0, %c0_0] : memref<8x2xi32, #tpu.memory_space<vmem>>, vector<8x1xi32>
    %c0_1 = arith.constant 0 : index
    %c1 = arith.constant 1 : index
    %1 = vector.load %arg0[%c0_1, %c1] : memref<8x2xi32, #tpu.memory_space<vmem>>, vector<8x1xi32>
    %2 = tpu.iota {dimensions = array<i32: 1>} : vector<8x100xi32>
    %3 = vector.broadcast %0 : vector<8x1xi32> to vector<8x100xi32>
    %4 = arith.cmpi eq, %2, %3 : vector<8x100xi32>
    %c50_i32 = arith.constant 50 : i32
    %5 = vector.broadcast %c50_i32 : i32 to vector<8x1xi32>
    %6 = arith.addi %1, %5 : vector<8x1xi32>
    %7 = vector.broadcast %6 : vector<8x1xi32> to vector<8x100xi32>
    %8 = arith.cmpi eq, %2, %7 : vector<8x100xi32>
    %9 = arith.ori %4, %8 : vector<8x100xi1>
    %10 = arith.extui %9 : vector<8x100xi1> to vector<8x100xi32>
    %11 = arith.sitofp %10 : vector<8x100xi32> to vector<8x100xf32>
    %12 = arith.truncf %11 : vector<8x100xf32> to vector<8x100xbf16>
    %c0_2 = arith.constant 0 : index
    %c0_3 = arith.constant 0 : index
    %13 = vector.load %arg1[%c0_2, %c0_3] : memref<100x192xbf16, #tpu.memory_space<vmem>>, vector<100x192xbf16>
    %cst = arith.constant dense<0.000000e+00> : vector<8x192xf32>
    %14 = tpu.matmul %12, %13, %cst {dimension_numbers = #tpu.dot_dimension_numbers<[1], [0], [0], [1], [0, 0, 1, 1], [], []>} : vector<8x100xbf16>, vector<100x192xbf16>, vector<8x192xf32> -> vector<8x192xf32>
    %c0_4 = arith.constant 0 : index
    %c0_5 = arith.constant 0 : index
    %15 = vector.load %arg2[%c0_4, %c0_5] : memref<1x192xf32, #tpu.memory_space<vmem>>, vector<1x192xf32>
    %16 = vector.broadcast %15 : vector<1x192xf32> to vector<8x192xf32>
    %17 = arith.addf %14, %16 : vector<8x192xf32>
    %c0_6 = arith.constant 0 : index
    %c0_7 = arith.constant 0 : index
    %18 = vector.load %arg3[%c0_6, %c0_7] : memref<64x192xbf16, #tpu.memory_space<vmem>>, vector<64x192xbf16>
    %c0_8 = arith.constant 0 : index
    %c0_9 = arith.constant 0 : index
    %19 = vector.load %arg4[%c0_8, %c0_9] : memref<1x192xf32, #tpu.memory_space<vmem>>, vector<1x192xf32>
    %c0_10 = arith.constant 0 : index
    %c0_11 = arith.constant 0 : index
    %20 = vector.load %arg5[%c0_10, %c0_11] : memref<1x64xf32, #tpu.memory_space<vmem>>, vector<1x64xf32>
    %21 = arith.truncf %20 : vector<1x64xf32> to vector<1x64xbf16>
    %cst_12 = arith.constant dense<0.000000e+00> : vector<1x192xf32>
    %22 = tpu.matmul %21, %18, %cst_12 {dimension_numbers = #tpu.dot_dimension_numbers<[1], [0], [0], [1], [0, 0, 1, 1], [], []>} : vector<1x64xbf16>, vector<64x192xbf16>, vector<1x192xf32> -> vector<1x192xf32>
    %23 = arith.addf %22, %19 : vector<1x192xf32>
    %24 = vector.extract_strided_slice %17 {offsets = [0, 0], sizes = [1, 192], strides = [1, 1]} : vector<8x192xf32> to vector<1x192xf32>
    %25 = vector.extract_strided_slice %24 {offsets = [0, 0], sizes = [1, 128], strides = [1, 1]} : vector<1x192xf32> to vector<1x128xf32>
    %26 = vector.extract_strided_slice %23 {offsets = [0, 0], sizes = [1, 128], strides = [1, 1]} : vector<1x192xf32> to vector<1x128xf32>
    %27 = arith.addf %25, %26 : vector<1x128xf32>
    %28 = arith.negf %27 : vector<1x128xf32>
    %29 = math.exp %28 : vector<1x128xf32>
    %cst_13 = arith.constant 1.000000e+00 : f32
    %30 = vector.broadcast %cst_13 : f32 to vector<1x128xf32>
    %31 = arith.addf %30, %29 : vector<1x128xf32>
    %32 = arith.divf %30, %31 : vector<1x128xf32>
    %33 = vector.extract_strided_slice %32 {offsets = [0, 0], sizes = [1, 64], strides = [1, 1]} : vector<1x128xf32> to vector<1x64xf32>
    %34 = vector.extract_strided_slice %32 {offsets = [0, 64], sizes = [1, 64], strides = [1, 1]} : vector<1x128xf32> to vector<1x64xf32>
    %35 = vector.extract_strided_slice %24 {offsets = [0, 128], sizes = [1, 64], strides = [1, 1]} : vector<1x192xf32> to vector<1x64xf32>
    %36 = vector.extract_strided_slice %23 {offsets = [0, 128], sizes = [1, 64], strides = [1, 1]} : vector<1x192xf32> to vector<1x64xf32>
    %37 = arith.mulf %33, %36 : vector<1x64xf32>
    %38 = arith.addf %35, %37 : vector<1x64xf32>
    %39 = math.tanh %38 : vector<1x64xf32>
    %cst_14 = arith.constant 1.000000e+00 : f32
    %40 = vector.broadcast %cst_14 : f32 to vector<1x64xf32>
    %41 = arith.subf %40, %34 : vector<1x64xf32>
    %42 = arith.mulf %41, %39 : vector<1x64xf32>
    %43 = arith.mulf %34, %20 : vector<1x64xf32>
    %44 = arith.addf %42, %43 : vector<1x64xf32>
    %45 = arith.truncf %44 : vector<1x64xf32> to vector<1x64xbf16>
    %cst_15 = arith.constant dense<0.000000e+00> : vector<1x192xf32>
    %46 = tpu.matmul %45, %18, %cst_15 {dimension_numbers = #tpu.dot_dimension_numbers<[1], [0], [0], [1], [0, 0, 1, 1], [], []>} : vector<1x64xbf16>, vector<64x192xbf16>, vector<1x192xf32> -> vector<1x192xf32>
    %47 = arith.addf %46, %19 : vector<1x192xf32>
    %48 = vector.extract_strided_slice %17 {offsets = [1, 0], sizes = [1, 192], strides = [1, 1]} : vector<8x192xf32> to vector<1x192xf32>
    %49 = vector.extract_strided_slice %48 {offsets = [0, 0], sizes = [1, 128], strides = [1, 1]} : vector<1x192xf32> to vector<1x128xf32>
    %50 = vector.extract_strided_slice %47 {offsets = [0, 0], sizes = [1, 128], strides = [1, 1]} : vector<1x192xf32> to vector<1x128xf32>
    %51 = arith.addf %49, %50 : vector<1x128xf32>
    %52 = arith.negf %51 : vector<1x128xf32>
    %53 = math.exp %52 : vector<1x128xf32>
    %cst_16 = arith.constant 1.000000e+00 : f32
    %54 = vector.broadcast %cst_16 : f32 to vector<1x128xf32>
    %55 = arith.addf %54, %53 : vector<1x128xf32>
    %56 = arith.divf %54, %55 : vector<1x128xf32>
    %57 = vector.extract_strided_slice %56 {offsets = [0, 0], sizes = [1, 64], strides = [1, 1]} : vector<1x128xf32> to vector<1x64xf32>
    %58 = vector.extract_strided_slice %56 {offsets = [0, 64], sizes = [1, 64], strides = [1, 1]} : vector<1x128xf32> to vector<1x64xf32>
    %59 = vector.extract_strided_slice %48 {offsets = [0, 128], sizes = [1, 64], strides = [1, 1]} : vector<1x192xf32> to vector<1x64xf32>
    %60 = vector.extract_strided_slice %47 {offsets = [0, 128], sizes = [1, 64], strides = [1, 1]} : vector<1x192xf32> to vector<1x64xf32>
    %61 = arith.mulf %57, %60 : vector<1x64xf32>
    %62 = arith.addf %59, %61 : vector<1x64xf32>
    %63 = math.tanh %62 : vector<1x64xf32>
    %cst_17 = arith.constant 1.000000e+00 : f32
    %64 = vector.broadcast %cst_17 : f32 to vector<1x64xf32>
    %65 = arith.subf %64, %58 : vector<1x64xf32>
    %66 = arith.mulf %65, %63 : vector<1x64xf32>
    %67 = arith.mulf %58, %44 : vector<1x64xf32>
    %68 = arith.addf %66, %67 : vector<1x64xf32>
    %69 = arith.truncf %68 : vector<1x64xf32> to vector<1x64xbf16>
    %cst_18 = arith.constant dense<0.000000e+00> : vector<1x192xf32>
    %70 = tpu.matmul %69, %18, %cst_18 {dimension_numbers = #tpu.dot_dimension_numbers<[1], [0], [0], [1], [0, 0, 1, 1], [], []>} : vector<1x64xbf16>, vector<64x192xbf16>, vector<1x192xf32> -> vector<1x192xf32>
    %71 = arith.addf %70, %19 : vector<1x192xf32>
    %72 = vector.extract_strided_slice %17 {offsets = [2, 0], sizes = [1, 192], strides = [1, 1]} : vector<8x192xf32> to vector<1x192xf32>
    %73 = vector.extract_strided_slice %72 {offsets = [0, 0], sizes = [1, 128], strides = [1, 1]} : vector<1x192xf32> to vector<1x128xf32>
    %74 = vector.extract_strided_slice %71 {offsets = [0, 0], sizes = [1, 128], strides = [1, 1]} : vector<1x192xf32> to vector<1x128xf32>
    %75 = arith.addf %73, %74 : vector<1x128xf32>
    %76 = arith.negf %75 : vector<1x128xf32>
    %77 = math.exp %76 : vector<1x128xf32>
    %cst_19 = arith.constant 1.000000e+00 : f32
    %78 = vector.broadcast %cst_19 : f32 to vector<1x128xf32>
    %79 = arith.addf %78, %77 : vector<1x128xf32>
    %80 = arith.divf %78, %79 : vector<1x128xf32>
    %81 = vector.extract_strided_slice %80 {offsets = [0, 0], sizes = [1, 64], strides = [1, 1]} : vector<1x128xf32> to vector<1x64xf32>
    %82 = vector.extract_strided_slice %80 {offsets = [0, 64], sizes = [1, 64], strides = [1, 1]} : vector<1x128xf32> to vector<1x64xf32>
    %83 = vector.extract_strided_slice %72 {offsets = [0, 128], sizes = [1, 64], strides = [1, 1]} : vector<1x192xf32> to vector<1x64xf32>
    %84 = vector.extract_strided_slice %71 {offsets = [0, 128], sizes = [1, 64], strides = [1, 1]} : vector<1x192xf32> to vector<1x64xf32>
    %85 = arith.mulf %81, %84 : vector<1x64xf32>
    %86 = arith.addf %83, %85 : vector<1x64xf32>
    %87 = math.tanh %86 : vector<1x64xf32>
    %cst_20 = arith.constant 1.000000e+00 : f32
    %88 = vector.broadcast %cst_20 : f32 to vector<1x64xf32>
    %89 = arith.subf %88, %82 : vector<1x64xf32>
    %90 = arith.mulf %89, %87 : vector<1x64xf32>
    %91 = arith.mulf %82, %68 : vector<1x64xf32>
    %92 = arith.addf %90, %91 : vector<1x64xf32>
    %93 = arith.truncf %92 : vector<1x64xf32> to vector<1x64xbf16>
    %cst_21 = arith.constant dense<0.000000e+00> : vector<1x192xf32>
    %94 = tpu.matmul %93, %18, %cst_21 {dimension_numbers = #tpu.dot_dimension_numbers<[1], [0], [0], [1], [0, 0, 1, 1], [], []>} : vector<1x64xbf16>, vector<64x192xbf16>, vector<1x192xf32> -> vector<1x192xf32>
    %95 = arith.addf %94, %19 : vector<1x192xf32>
    %96 = vector.extract_strided_slice %17 {offsets = [3, 0], sizes = [1, 192], strides = [1, 1]} : vector<8x192xf32> to vector<1x192xf32>
    %97 = vector.extract_strided_slice %96 {offsets = [0, 0], sizes = [1, 128], strides = [1, 1]} : vector<1x192xf32> to vector<1x128xf32>
    %98 = vector.extract_strided_slice %95 {offsets = [0, 0], sizes = [1, 128], strides = [1, 1]} : vector<1x192xf32> to vector<1x128xf32>
    %99 = arith.addf %97, %98 : vector<1x128xf32>
    %100 = arith.negf %99 : vector<1x128xf32>
    %101 = math.exp %100 : vector<1x128xf32>
    %cst_22 = arith.constant 1.000000e+00 : f32
    %102 = vector.broadcast %cst_22 : f32 to vector<1x128xf32>
    %103 = arith.addf %102, %101 : vector<1x128xf32>
    %104 = arith.divf %102, %103 : vector<1x128xf32>
    %105 = vector.extract_strided_slice %104 {offsets = [0, 0], sizes = [1, 64], strides = [1, 1]} : vector<1x128xf32> to vector<1x64xf32>
    %106 = vector.extract_strided_slice %104 {offsets = [0, 64], sizes = [1, 64], strides = [1, 1]} : vector<1x128xf32> to vector<1x64xf32>
    %107 = vector.extract_strided_slice %96 {offsets = [0, 128], sizes = [1, 64], strides = [1, 1]} : vector<1x192xf32> to vector<1x64xf32>
    %108 = vector.extract_strided_slice %95 {offsets = [0, 128], sizes = [1, 64], strides = [1, 1]} : vector<1x192xf32> to vector<1x64xf32>
    %109 = arith.mulf %105, %108 : vector<1x64xf32>
    %110 = arith.addf %107, %109 : vector<1x64xf32>
    %111 = math.tanh %110 : vector<1x64xf32>
    %cst_23 = arith.constant 1.000000e+00 : f32
    %112 = vector.broadcast %cst_23 : f32 to vector<1x64xf32>
    %113 = arith.subf %112, %106 : vector<1x64xf32>
    %114 = arith.mulf %113, %111 : vector<1x64xf32>
    %115 = arith.mulf %106, %92 : vector<1x64xf32>
    %116 = arith.addf %114, %115 : vector<1x64xf32>
    %117 = arith.truncf %116 : vector<1x64xf32> to vector<1x64xbf16>
    %cst_24 = arith.constant dense<0.000000e+00> : vector<1x192xf32>
    %118 = tpu.matmul %117, %18, %cst_24 {dimension_numbers = #tpu.dot_dimension_numbers<[1], [0], [0], [1], [0, 0, 1, 1], [], []>} : vector<1x64xbf16>, vector<64x192xbf16>, vector<1x192xf32> -> vector<1x192xf32>
    %119 = arith.addf %118, %19 : vector<1x192xf32>
    %120 = vector.extract_strided_slice %17 {offsets = [4, 0], sizes = [1, 192], strides = [1, 1]} : vector<8x192xf32> to vector<1x192xf32>
    %121 = vector.extract_strided_slice %120 {offsets = [0, 0], sizes = [1, 128], strides = [1, 1]} : vector<1x192xf32> to vector<1x128xf32>
    %122 = vector.extract_strided_slice %119 {offsets = [0, 0], sizes = [1, 128], strides = [1, 1]} : vector<1x192xf32> to vector<1x128xf32>
    %123 = arith.addf %121, %122 : vector<1x128xf32>
    %124 = arith.negf %123 : vector<1x128xf32>
    %125 = math.exp %124 : vector<1x128xf32>
    %cst_25 = arith.constant 1.000000e+00 : f32
    %126 = vector.broadcast %cst_25 : f32 to vector<1x128xf32>
    %127 = arith.addf %126, %125 : vector<1x128xf32>
    %128 = arith.divf %126, %127 : vector<1x128xf32>
    %129 = vector.extract_strided_slice %128 {offsets = [0, 0], sizes = [1, 64], strides = [1, 1]} : vector<1x128xf32> to vector<1x64xf32>
    %130 = vector.extract_strided_slice %128 {offsets = [0, 64], sizes = [1, 64], strides = [1, 1]} : vector<1x128xf32> to vector<1x64xf32>
    %131 = vector.extract_strided_slice %120 {offsets = [0, 128], sizes = [1, 64], strides = [1, 1]} : vector<1x192xf32> to vector<1x64xf32>
    %132 = vector.extract_strided_slice %119 {offsets = [0, 128], sizes = [1, 64], strides = [1, 1]} : vector<1x192xf32> to vector<1x64xf32>
    %133 = arith.mulf %129, %132 : vector<1x64xf32>
    %134 = arith.addf %131, %133 : vector<1x64xf32>
    %135 = math.tanh %134 : vector<1x64xf32>
    %cst_26 = arith.constant 1.000000e+00 : f32
    %136 = vector.broadcast %cst_26 : f32 to vector<1x64xf32>
    %137 = arith.subf %136, %130 : vector<1x64xf32>
    %138 = arith.mulf %137, %135 : vector<1x64xf32>
    %139 = arith.mulf %130, %116 : vector<1x64xf32>
    %140 = arith.addf %138, %139 : vector<1x64xf32>
    %141 = arith.truncf %140 : vector<1x64xf32> to vector<1x64xbf16>
    %cst_27 = arith.constant dense<0.000000e+00> : vector<1x192xf32>
    %142 = tpu.matmul %141, %18, %cst_27 {dimension_numbers = #tpu.dot_dimension_numbers<[1], [0], [0], [1], [0, 0, 1, 1], [], []>} : vector<1x64xbf16>, vector<64x192xbf16>, vector<1x192xf32> -> vector<1x192xf32>
    %143 = arith.addf %142, %19 : vector<1x192xf32>
    %144 = vector.extract_strided_slice %17 {offsets = [5, 0], sizes = [1, 192], strides = [1, 1]} : vector<8x192xf32> to vector<1x192xf32>
    %145 = vector.extract_strided_slice %144 {offsets = [0, 0], sizes = [1, 128], strides = [1, 1]} : vector<1x192xf32> to vector<1x128xf32>
    %146 = vector.extract_strided_slice %143 {offsets = [0, 0], sizes = [1, 128], strides = [1, 1]} : vector<1x192xf32> to vector<1x128xf32>
    %147 = arith.addf %145, %146 : vector<1x128xf32>
    %148 = arith.negf %147 : vector<1x128xf32>
    %149 = math.exp %148 : vector<1x128xf32>
    %cst_28 = arith.constant 1.000000e+00 : f32
    %150 = vector.broadcast %cst_28 : f32 to vector<1x128xf32>
    %151 = arith.addf %150, %149 : vector<1x128xf32>
    %152 = arith.divf %150, %151 : vector<1x128xf32>
    %153 = vector.extract_strided_slice %152 {offsets = [0, 0], sizes = [1, 64], strides = [1, 1]} : vector<1x128xf32> to vector<1x64xf32>
    %154 = vector.extract_strided_slice %152 {offsets = [0, 64], sizes = [1, 64], strides = [1, 1]} : vector<1x128xf32> to vector<1x64xf32>
    %155 = vector.extract_strided_slice %144 {offsets = [0, 128], sizes = [1, 64], strides = [1, 1]} : vector<1x192xf32> to vector<1x64xf32>
    %156 = vector.extract_strided_slice %143 {offsets = [0, 128], sizes = [1, 64], strides = [1, 1]} : vector<1x192xf32> to vector<1x64xf32>
    %157 = arith.mulf %153, %156 : vector<1x64xf32>
    %158 = arith.addf %155, %157 : vector<1x64xf32>
    %159 = math.tanh %158 : vector<1x64xf32>
    %cst_29 = arith.constant 1.000000e+00 : f32
    %160 = vector.broadcast %cst_29 : f32 to vector<1x64xf32>
    %161 = arith.subf %160, %154 : vector<1x64xf32>
    %162 = arith.mulf %161, %159 : vector<1x64xf32>
    %163 = arith.mulf %154, %140 : vector<1x64xf32>
    %164 = arith.addf %162, %163 : vector<1x64xf32>
    %165 = arith.truncf %164 : vector<1x64xf32> to vector<1x64xbf16>
    %cst_30 = arith.constant dense<0.000000e+00> : vector<1x192xf32>
    %166 = tpu.matmul %165, %18, %cst_30 {dimension_numbers = #tpu.dot_dimension_numbers<[1], [0], [0], [1], [0, 0, 1, 1], [], []>} : vector<1x64xbf16>, vector<64x192xbf16>, vector<1x192xf32> -> vector<1x192xf32>
    %167 = arith.addf %166, %19 : vector<1x192xf32>
    %168 = vector.extract_strided_slice %17 {offsets = [6, 0], sizes = [1, 192], strides = [1, 1]} : vector<8x192xf32> to vector<1x192xf32>
    %169 = vector.extract_strided_slice %168 {offsets = [0, 0], sizes = [1, 128], strides = [1, 1]} : vector<1x192xf32> to vector<1x128xf32>
    %170 = vector.extract_strided_slice %167 {offsets = [0, 0], sizes = [1, 128], strides = [1, 1]} : vector<1x192xf32> to vector<1x128xf32>
    %171 = arith.addf %169, %170 : vector<1x128xf32>
    %172 = arith.negf %171 : vector<1x128xf32>
    %173 = math.exp %172 : vector<1x128xf32>
    %cst_31 = arith.constant 1.000000e+00 : f32
    %174 = vector.broadcast %cst_31 : f32 to vector<1x128xf32>
    %175 = arith.addf %174, %173 : vector<1x128xf32>
    %176 = arith.divf %174, %175 : vector<1x128xf32>
    %177 = vector.extract_strided_slice %176 {offsets = [0, 0], sizes = [1, 64], strides = [1, 1]} : vector<1x128xf32> to vector<1x64xf32>
    %178 = vector.extract_strided_slice %176 {offsets = [0, 64], sizes = [1, 64], strides = [1, 1]} : vector<1x128xf32> to vector<1x64xf32>
    %179 = vector.extract_strided_slice %168 {offsets = [0, 128], sizes = [1, 64], strides = [1, 1]} : vector<1x192xf32> to vector<1x64xf32>
    %180 = vector.extract_strided_slice %167 {offsets = [0, 128], sizes = [1, 64], strides = [1, 1]} : vector<1x192xf32> to vector<1x64xf32>
    %181 = arith.mulf %177, %180 : vector<1x64xf32>
    %182 = arith.addf %179, %181 : vector<1x64xf32>
    %183 = math.tanh %182 : vector<1x64xf32>
    %cst_32 = arith.constant 1.000000e+00 : f32
    %184 = vector.broadcast %cst_32 : f32 to vector<1x64xf32>
    %185 = arith.subf %184, %178 : vector<1x64xf32>
    %186 = arith.mulf %185, %183 : vector<1x64xf32>
    %187 = arith.mulf %178, %164 : vector<1x64xf32>
    %188 = arith.addf %186, %187 : vector<1x64xf32>
    %189 = arith.truncf %188 : vector<1x64xf32> to vector<1x64xbf16>
    %cst_33 = arith.constant dense<0.000000e+00> : vector<1x192xf32>
    %190 = tpu.matmul %189, %18, %cst_33 {dimension_numbers = #tpu.dot_dimension_numbers<[1], [0], [0], [1], [0, 0, 1, 1], [], []>} : vector<1x64xbf16>, vector<64x192xbf16>, vector<1x192xf32> -> vector<1x192xf32>
    %191 = arith.addf %190, %19 : vector<1x192xf32>
    %192 = vector.extract_strided_slice %17 {offsets = [7, 0], sizes = [1, 192], strides = [1, 1]} : vector<8x192xf32> to vector<1x192xf32>
    %193 = vector.extract_strided_slice %192 {offsets = [0, 0], sizes = [1, 128], strides = [1, 1]} : vector<1x192xf32> to vector<1x128xf32>
    %194 = vector.extract_strided_slice %191 {offsets = [0, 0], sizes = [1, 128], strides = [1, 1]} : vector<1x192xf32> to vector<1x128xf32>
    %195 = arith.addf %193, %194 : vector<1x128xf32>
    %196 = arith.negf %195 : vector<1x128xf32>
    %197 = math.exp %196 : vector<1x128xf32>
    %cst_34 = arith.constant 1.000000e+00 : f32
    %198 = vector.broadcast %cst_34 : f32 to vector<1x128xf32>
    %199 = arith.addf %198, %197 : vector<1x128xf32>
    %200 = arith.divf %198, %199 : vector<1x128xf32>
    %201 = vector.extract_strided_slice %200 {offsets = [0, 0], sizes = [1, 64], strides = [1, 1]} : vector<1x128xf32> to vector<1x64xf32>
    %202 = vector.extract_strided_slice %200 {offsets = [0, 64], sizes = [1, 64], strides = [1, 1]} : vector<1x128xf32> to vector<1x64xf32>
    %203 = vector.extract_strided_slice %192 {offsets = [0, 128], sizes = [1, 64], strides = [1, 1]} : vector<1x192xf32> to vector<1x64xf32>
    %204 = vector.extract_strided_slice %191 {offsets = [0, 128], sizes = [1, 64], strides = [1, 1]} : vector<1x192xf32> to vector<1x64xf32>
    %205 = arith.mulf %201, %204 : vector<1x64xf32>
    %206 = arith.addf %203, %205 : vector<1x64xf32>
    %207 = math.tanh %206 : vector<1x64xf32>
    %cst_35 = arith.constant 1.000000e+00 : f32
    %208 = vector.broadcast %cst_35 : f32 to vector<1x64xf32>
    %209 = arith.subf %208, %202 : vector<1x64xf32>
    %210 = arith.mulf %209, %207 : vector<1x64xf32>
    %211 = arith.mulf %202, %188 : vector<1x64xf32>
    %212 = arith.addf %210, %211 : vector<1x64xf32>
    %213 = vector.extract_strided_slice %44 {offsets = [0, 0], sizes = [1, 32], strides = [1, 1]} : vector<1x64xf32> to vector<1x32xf32>
    %214 = vector.extract_strided_slice %68 {offsets = [0, 0], sizes = [1, 32], strides = [1, 1]} : vector<1x64xf32> to vector<1x32xf32>
    %215 = vector.extract_strided_slice %92 {offsets = [0, 0], sizes = [1, 32], strides = [1, 1]} : vector<1x64xf32> to vector<1x32xf32>
    %216 = vector.extract_strided_slice %116 {offsets = [0, 0], sizes = [1, 32], strides = [1, 1]} : vector<1x64xf32> to vector<1x32xf32>
    %217 = vector.extract_strided_slice %140 {offsets = [0, 0], sizes = [1, 32], strides = [1, 1]} : vector<1x64xf32> to vector<1x32xf32>
    %218 = vector.extract_strided_slice %164 {offsets = [0, 0], sizes = [1, 32], strides = [1, 1]} : vector<1x64xf32> to vector<1x32xf32>
    %219 = vector.extract_strided_slice %188 {offsets = [0, 0], sizes = [1, 32], strides = [1, 1]} : vector<1x64xf32> to vector<1x32xf32>
    %220 = vector.extract_strided_slice %212 {offsets = [0, 0], sizes = [1, 32], strides = [1, 1]} : vector<1x64xf32> to vector<1x32xf32>
    %221 = tpu.concatenate %213, %214, %215, %216, %217, %218, %219, %220 in 0 : vector<1x32xf32>, vector<1x32xf32>, vector<1x32xf32>, vector<1x32xf32>, vector<1x32xf32>, vector<1x32xf32>, vector<1x32xf32>, vector<1x32xf32> -> vector<8x32xf32>
    %222 = vector.extract_strided_slice %212 {offsets = [0, 32], sizes = [1, 32], strides = [1, 1]} : vector<1x64xf32> to vector<1x32xf32>
    %223 = vector.extract_strided_slice %188 {offsets = [0, 32], sizes = [1, 32], strides = [1, 1]} : vector<1x64xf32> to vector<1x32xf32>
    %224 = vector.extract_strided_slice %164 {offsets = [0, 32], sizes = [1, 32], strides = [1, 1]} : vector<1x64xf32> to vector<1x32xf32>
    %225 = vector.extract_strided_slice %140 {offsets = [0, 32], sizes = [1, 32], strides = [1, 1]} : vector<1x64xf32> to vector<1x32xf32>
    %226 = vector.extract_strided_slice %116 {offsets = [0, 32], sizes = [1, 32], strides = [1, 1]} : vector<1x64xf32> to vector<1x32xf32>
    %227 = vector.extract_strided_slice %92 {offsets = [0, 32], sizes = [1, 32], strides = [1, 1]} : vector<1x64xf32> to vector<1x32xf32>
    %228 = vector.extract_strided_slice %68 {offsets = [0, 32], sizes = [1, 32], strides = [1, 1]} : vector<1x64xf32> to vector<1x32xf32>
    %229 = vector.extract_strided_slice %44 {offsets = [0, 32], sizes = [1, 32], strides = [1, 1]} : vector<1x64xf32> to vector<1x32xf32>
    %230 = tpu.concatenate %222, %223, %224, %225, %226, %227, %228, %229 in 0 : vector<1x32xf32>, vector<1x32xf32>, vector<1x32xf32>, vector<1x32xf32>, vector<1x32xf32>, vector<1x32xf32>, vector<1x32xf32>, vector<1x32xf32> -> vector<8x32xf32>
    %231 = tpu.concatenate %221, %230 in 1 : vector<8x32xf32>, vector<8x32xf32> -> vector<8x64xf32>
    %c0_36 = arith.constant 0 : index
    %c0_37 = arith.constant 0 : index
    %232 = vector.load %arg6[%c0_36, %c0_37] : memref<8x64xf32, #tpu.memory_space<vmem>>, vector<8x64xf32>
    tpu.vector_store %arg6[%c0_36, %c0_37], %231 {strides = array<i32>} : memref<8x64xf32, #tpu.memory_space<vmem>>, vector<8x64xf32>,
    %233 = vector.extract_strided_slice %212 {offsets = [0, 0], sizes = [1, 32], strides = [1, 1]} : vector<1x64xf32> to vector<1x32xf32>
    %234 = vector.extract_strided_slice %44 {offsets = [0, 32], sizes = [1, 32], strides = [1, 1]} : vector<1x64xf32> to vector<1x32xf32>
    %235 = tpu.concatenate %233, %234 in 1 : vector<1x32xf32>, vector<1x32xf32> -> vector<1x64xf32>
    %c0_38 = arith.constant 0 : index
    %c0_39 = arith.constant 0 : index
    %236 = vector.load %arg7[%c0_38, %c0_39] : memref<1x64xf32, #tpu.memory_space<vmem>>, vector<1x64xf32>
    tpu.vector_store %arg7[%c0_38, %c0_39], %235 {strides = array<i32>} : memref<1x64xf32, #tpu.memory_space<vmem>>, vector<1x64xf32>,
    return
  }
}

</mosaic_0001>

<llo_original>
// kernel: tpu_custom_call.1
$region0: #{tpu_custom_call.1}
  #allocation0 [shape = 'u32[]', space=smem, size = 0x4, offset = 0x4, fixed_abs, tag = 'smem constant byte address 0x4 - core index']
  #allocation1 [shape = 'u32[72,128]{1,0:T(1,128)}', space=vmem, size = 0x9000, scoped, tag = 'internal scratch']
  %s0 = inlined_call_operand.vmem [shape: s32[8,2], index: 0, kind: input, shape index: {}]
  %s1 = inlined_call_operand.vmem [shape: bf16[100,192], index: 1, kind: input, shape index: {}]
  %s2 = inlined_call_operand.vmem [shape: f32[1,192], index: 2, kind: input, shape index: {}]
  %s3 = inlined_call_operand.vmem [shape: bf16[64,192], index: 3, kind: input, shape index: {}]
  %s4 = inlined_call_operand.vmem [shape: f32[1,192], index: 4, kind: input, shape index: {}]
  %s5 = inlined_call_operand.vmem [shape: f32[1,64], index: 5, kind: input, shape index: {}]
  %s6 = inlined_call_operand.hbm [shape: f32[8,64], index: 6, kind: output, shape index: {0}]
  %s7 = inlined_call_operand.hbm [shape: f32[1,64], index: 7, kind: output, shape index: {1}]
  %8 = xla_tuple %s6, %s7
  %s9 = sld [smem:[#allocation0]]
  $region42: #{tpu_custom_call.1} parent=0
    _
  %s11 = ssub.s32 1, %s9
  %s12 = scalar_select 0, %s11, %s9
  $region1: #{tpu_custom_call.1} parent=0
    #allocation2 [shape = 'u8[4096]{0}', space=vmem, size = 0x1000, scoped, tag = 'output window, operand 0, single buffered']
    #allocation3 [shape = 's32[1]{0}', space=sflag, size = 0x4, scoped, tag = 'scoped memory for tpu_custom_call.1']
    #allocation4 [shape = 'u8[512]{0}', space=vmem, size = 0x400, scoped, tag = 'output window, operand 1, single buffered']
    #allocation5 [shape = 's32[1]{0}', space=sflag, size = 0x4, scoped, tag = 'scoped memory for tpu_custom_call.1']
    %13 = vsyncpa [#allocation3], 0
    %14 = vsyncpa [#allocation5], 0
    // Predicated region
    $region2: #{tpu_custom_call.1} parent=1 // pred_check
      _
    $region3: #{tpu_custom_call.1} parent=1 // pred_check_branch
      %16 = sbr.rel (0) target = $region5
    $region4: #{tpu_custom_call.1} parent=1 // pred_region
      _
    $region5: #{tpu_custom_call.1} parent=1 // pred_fallthru
      _
    // Predicated region
    $region6: #{tpu_custom_call.1} parent=1 // pred_check
      _
    $region7: #{tpu_custom_call.1} parent=1 // pred_check_branch
      %18 = sbr.rel (0) target = $region9
    $region8: #{tpu_custom_call.1} parent=1 // pred_region
      _
    $region9: #{tpu_custom_call.1} parent=1 // pred_fallthru
      _
    // Predicated region
    $region10: #{tpu_custom_call.1} parent=1 // pred_check
      _
    $region11: #{tpu_custom_call.1} parent=1 // pred_check_branch
      %20 = sbr.rel (0) target = $region13
    $region12: #{tpu_custom_call.1} parent=1 // pred_region
      _
    $region13: #{tpu_custom_call.1} parent=1 // pred_fallthru
      _
    // Predicated region
    $region14: #{tpu_custom_call.1} parent=1 // pred_check
      _
    $region15: #{tpu_custom_call.1} parent=1 // pred_check_branch
      %22 = sbr.rel (0) target = $region17
    $region16: #{tpu_custom_call.1} parent=1 // pred_region
      _
    $region17: #{tpu_custom_call.1} parent=1 // pred_fallthru
      _
    // Predicated region
    $region18: #{tpu_custom_call.1} parent=1 // pred_check
      _
    $region19: #{tpu_custom_call.1} parent=1 // pred_check_branch
      %24 = sbr.rel (0) target = $region21
    $region20: #{tpu_custom_call.1} parent=1 // pred_region
      _
    $region21: #{tpu_custom_call.1} parent=1 // pred_fallthru
      _
    // Predicated region
    $region22: #{tpu_custom_call.1} parent=1 // pred_check
      _
    $region23: #{tpu_custom_call.1} parent=1 // pred_check_branch
      %26 = sbr.rel (0) target = $region25
    $region24: #{tpu_custom_call.1} parent=1 // pred_region
      _
    $region25: #{tpu_custom_call.1} parent=1 // pred_fallthru
      _
    %v28 = vld [vmem:[%s0] sm:$0xff]
    %v29 = vlaneseq
    %v30 = vand.u32 %v29, 127
    %31 = vset.pattern.permute.xlu0 0
    %32 = vperm.xlu0 %31, %v28
    %v33 = vpop.permute.xlu0 %32
    %vm34 = vcmp.eq.s32.totalorder %v30, %v33
    %v35 = vadd.s32 %v28, 50
    %36 = vset.pattern.permute.xlu0 1
    %37 = vperm.xlu0 %36, %v35
    %v38 = vpop.permute.xlu0 %37
    %vm39 = vcmp.eq.s32.totalorder %v30, %v38
    %vm40 = vmor %vm34, %vm39
    %v41 = vsel %vm40, 1, 0
    %v42 = vcvt.s32.f32 %v41
    %v43 = vpack.c.bf16 %v42, %v42
    %v44 = vld [vmem:[%s1] sm:$0xff]
    %v45 = vld [vmem:[%s1 + $0x8] sm:$0xff]
    %v46 = vld [vmem:[%s1 + $0x10] sm:$0xff]
    %v47 = vld [vmem:[%s1 + $0x18] sm:$0xff]
    %v48 = vld [vmem:[%s1 + $0x20] sm:$0xff]
    %v49 = vld [vmem:[%s1 + $0x28] sm:$0xff]
    %v50 = vld [vmem:[%s1 + $0x30] sm:$0xff]
    %v51 = vld [vmem:[%s1 + $0x38] sm:$0xff]
    %v52 = vld [vmem:[%s1 + $0x40] sm:$0xff]
    %v53 = vld [vmem:[%s1 + $0x48] sm:$0xff]
    %v54 = vld [vmem:[%s1 + $0x50] sm:$0xff]
    %v55 = vld [vmem:[%s1 + $0x58] sm:$0xff]
    %v56 = vld [vmem:[%s1 + $0x60] sm:$0x33]
    %v57 = vld [vmem:[%s2] sm:$0x3]
    %v59 = vperm.slane %v57, 0
    %v60 = vperm.slane %v57, 1
    %v76 = vunpack.c.l.b16 %v44
    %v77 = vunpack.c.h.b16 %v44
    %v78 = vunpack.c.l.b16 %v45
    %v79 = vunpack.c.h.b16 %v45
    %v80 = vunpack.c.l.b16 %v46
    %v81 = vunpack.c.h.b16 %v46
    %v82 = vunpack.c.l.b16 %v47
    %v83 = vunpack.c.h.b16 %v47
    %v84 = vunpack.c.l.b16 %v48
    %v85 = vunpack.c.h.b16 %v48
    %v86 = vunpack.c.l.b16 %v49
    %v87 = vunpack.c.h.b16 %v49
    %v88 = vunpack.c.l.b16 %v50
    %v89 = vunpack.c.h.b16 %v50
    %v90 = vunpack.c.l.b16 %v51
    %v91 = vunpack.c.h.b16 %v51
    %v92 = vunpack.c.l.b16 %v52
    %v93 = vunpack.c.h.b16 %v52
    %v94 = vunpack.c.l.b16 %v53
    %v95 = vunpack.c.h.b16 %v53
    %v96 = vunpack.c.l.b16 %v54
    %v97 = vunpack.c.h.b16 %v54
    %v98 = vunpack.c.l.b16 %v55
    %v99 = vunpack.c.h.b16 %v55
    %v100 = vunpack.c.l.b16 %v56
    %v101 = vunpack.c.h.b16 %v56
    %v102 = vpack.c.b16 %v78, %v76
    %v103 = vpack.c.b16 %v79, %v77
    %v104 = vpack.c.b16 %v82, %v80
    %v105 = vpack.c.b16 %v83, %v81
    %v106 = vpack.c.b16 %v86, %v84
    %v107 = vpack.c.b16 %v87, %v85
    %v108 = vpack.c.b16 %v90, %v88
    %v109 = vpack.c.b16 %v91, %v89
    %v110 = vpack.c.b16 %v94, %v92
    %v111 = vpack.c.b16 %v95, %v93
    %v112 = vpack.c.b16 %v98, %v96
    %v113 = vpack.c.b16 %v99, %v97
    %v114 = vpack.c.b16 %v100, %v100
    %v115 = vpack.c.b16 %v101, %v101
    %vm128 = vcmask 818176
    %v130 = vsel %vm128, %v43, 0
    %vm132 = vcmask 1041408
    %v134 = vsel %vm132, %v114, 0
    %v137 = vsel %vm132, %v115, 0
    %139 = vmatpush.bf16.msra.mxu0 0
    %140 = vmatpush.bf16.msra.mxu0 %v134
    %141 = vmatpush.bf16.msra.mxu0 %v112
    %142 = vmatpush.bf16.msra.mxu0 %v110
    %143 = vmatpush.bf16.msra.mxu0 %v108
    %144 = vmatpush.bf16.msra.mxu0 %v106
    %145 = vmatpush.bf16.msra.mxu0 %v104
    %146 = vmatpush.bf16.msra.mxu0 %v102
    %147 = vmatmul.bf16.gmra.mxu0 %v130
    %v148 = vpop.f32.mrf.mxu0
    %v149 = vadd.f32 %v59, %v148
    %v150 = vpop.f32.mrf.mxu0
    %151 = vdwg.mxu0
    %152 = vmatpush.bf16.msra.mxu0 0
    %153 = vmatpush.bf16.msra.mxu0 %v137
    %154 = vmatpush.bf16.msra.mxu0 %v113
    %155 = vmatpush.bf16.msra.mxu0 %v111
    %156 = vmatpush.bf16.msra.mxu0 %v109
    %157 = vmatpush.bf16.msra.mxu0 %v107
    %158 = vmatpush.bf16.msra.mxu0 %v105
    %159 = vmatpush.bf16.msra.mxu0 %v103
    %160 = vmatmul.bf16.gmra.mxu0 %v130
    %v161 = vpop.f32.mrf.mxu0
    %v162 = vadd.f32 %v60, %v161
    %v163 = vpop.f32.mrf.mxu0
    %164 = vdwg.mxu0
    %v165 = vld [vmem:[%s3] sm:$0xff]
    %v166 = vld [vmem:[%s3 + $0x8] sm:$0xff]
    %v167 = vld [vmem:[%s3 + $0x10] sm:$0xff]
    %v168 = vld [vmem:[%s3 + $0x18] sm:$0xff]
    %v169 = vld [vmem:[%s3 + $0x20] sm:$0xff]
    %v170 = vld [vmem:[%s3 + $0x28] sm:$0xff]
    %v171 = vld [vmem:[%s3 + $0x30] sm:$0xff]
    %v172 = vld [vmem:[%s3 + $0x38] sm:$0xff]
    %v173 = vld [vmem:[%s4] sm:$0x3]
    %v174 = vld [vmem:[%s5] sm:$0x1]
    %v175 = vpack.c.bf16 %v174, %v174
    %v184 = vunpack.c.l.b16 %v165
    %v185 = vunpack.c.h.b16 %v165
    %v186 = vunpack.c.l.b16 %v166
    %v187 = vunpack.c.h.b16 %v166
    %v188 = vunpack.c.l.b16 %v167
    %v189 = vunpack.c.h.b16 %v167
    %v190 = vunpack.c.l.b16 %v168
    %v191 = vunpack.c.h.b16 %v168
    %v192 = vunpack.c.l.b16 %v169
    %v193 = vunpack.c.h.b16 %v169
    %v194 = vunpack.c.l.b16 %v170
    %v195 = vunpack.c.h.b16 %v170
    %v196 = vunpack.c.l.b16 %v171
    %v197 = vunpack.c.h.b16 %v171
    %v198 = vunpack.c.l.b16 %v172
    %v199 = vunpack.c.h.b16 %v172
    %v200 = vpack.c.b16 %v186, %v184
    %v201 = vpack.c.b16 %v187, %v185
    %v202 = vpack.c.b16 %v190, %v188
    %v203 = vpack.c.b16 %v191, %v189
    %v204 = vpack.c.b16 %v194, %v192
    %v205 = vpack.c.b16 %v195, %v193
    %v206 = vpack.c.b16 %v198, %v196
    %v207 = vpack.c.b16 %v199, %v197
    %v217 = vperm.slane %v173, 0
    %v218 = vperm.slane %v173, 1
    %vm221 = vcmask 523264
    %v223 = vsel %vm221, %v175, 0
    %225 = vmatpush.bf16.msra.mxu0 0
    %226 = vmatpush.bf16.msra.mxu0 0
    %227 = vmatpush.bf16.msra.mxu0 0
    %228 = vmatpush.bf16.msra.mxu0 0
    %229 = vmatpush.bf16.msra.mxu0 %v206
    %230 = vmatpush.bf16.msra.mxu0 %v204
    %231 = vmatpush.bf16.msra.mxu0 %v202
    %232 = vmatpush.bf16.msra.mxu0 %v200
    %233 = vmatmul.bf16.gmra.mxu0 %v223
    %v234 = vpop.f32.mrf.mxu0
    %v235 = vadd.f32 %v217, %v234
    %v236 = vpop.f32.mrf.mxu0
    %237 = vdwg.mxu0
    %238 = vmatpush.bf16.msra.mxu0 0
    %239 = vmatpush.bf16.msra.mxu0 0
    %240 = vmatpush.bf16.msra.mxu0 0
    %241 = vmatpush.bf16.msra.mxu0 0
    %242 = vmatpush.bf16.msra.mxu0 %v207
    %243 = vmatpush.bf16.msra.mxu0 %v205
    %244 = vmatpush.bf16.msra.mxu0 %v203
    %245 = vmatpush.bf16.msra.mxu0 %v201
    %246 = vmatmul.bf16.gmra.mxu0 %v223
    %v247 = vpop.f32.mrf.mxu0
    %v248 = vadd.f32 %v218, %v247
    %v249 = vpop.f32.mrf.mxu0
    %250 = vdwg.mxu0
    %v251 = vadd.f32 %v149, %v235
    %v252 = vxor.u32 %v251, 2147483648
    %v253 = vmul.f32 %v252, 1.442695
    %v254 = vpow.pop %v253
    %v255 = vadd.f32 %v254, 1.0
    %v256 = vrcp.pop %v255
    %v257 = vmul.f32 %v255, %v256
    %v258 = vsub.f32 1.0, %v257
    %v259 = vmul.f32 %v256, %v258
    %v260 = vadd.f32 %v256, %v259
    %vm261 = vweird.f32 %v255
    %vm262 = vweird.f32 %v256
    %vm263 = vmor %vm261, %vm262
    %v264 = vsel %vm263, %v256, %v260
    %v265 = vand.u32 2147483647, %v255
    %vm266 = vcmp.eq.f32.partialorder %v265, 8.507059e+37
    %v267 = vand.u32 %v255, 2147483648
    %v268 = vor.u32 1.1754944e-38, %v267
    %v269 = vsel %vm266, %v268, %v264
    %v270 = vmul.f32 1.0, %v269
    %v271 = vmul.f32 %v270, %v248
    %v272 = vadd.f32 %v162, %v271
    %v273 = vtanh.pop %v272
    %v274 = vsub.f32 1.0, %v270
    %276 = vrot.lane.b32.xlu0 %v273, 64
    %v277 = vpop.permute.xlu0 %276
    %v279 = vmul.f32 %v274, %v277
    %v281 = vperm.slane %v174, 0
    %282 = vrot.lane.b32.xlu0 %v281, 64
    %v283 = vpop.permute.xlu0 %282
    %v285 = vmul.f32 %v270, %v283
    %v286 = vadd.f32 %v279, %v285
    %v287 = vpack.c.bf16 %v286, %v286
    %289 = vrot.lane.b32.xlu0 %v287, 64
    %v290 = vpop.permute.xlu0 %289
    %v292 = vsel %vm221, %v290, 0
    %294 = vmatpush.bf16.msra.mxu0 0
    %295 = vmatpush.bf16.msra.mxu0 0
    %296 = vmatpush.bf16.msra.mxu0 0
    %297 = vmatpush.bf16.msra.mxu0 0
    %298 = vmatpush.bf16.msra.mxu0 %v206
    %299 = vmatpush.bf16.msra.mxu0 %v204
    %300 = vmatpush.bf16.msra.mxu0 %v202
    %301 = vmatpush.bf16.msra.mxu0 %v200
    %302 = vmatmul.bf16.gmra.mxu0 %v292
    %v303 = vpop.f32.mrf.mxu0
    %v304 = vadd.f32 %v217, %v303
    %v305 = vpop.f32.mrf.mxu0
    %306 = vdwg.mxu0
    %307 = vmatpush.bf16.msra.mxu0 0
    %308 = vmatpush.bf16.msra.mxu0 0
    %309 = vmatpush.bf16.msra.mxu0 0
    %310 = vmatpush.bf16.msra.mxu0 0
    %311 = vmatpush.bf16.msra.mxu0 %v207
    %312 = vmatpush.bf16.msra.mxu0 %v205
    %313 = vmatpush.bf16.msra.mxu0 %v203
    %314 = vmatpush.bf16.msra.mxu0 %v201
    %315 = vmatmul.bf16.gmra.mxu0 %v292
    %v316 = vpop.f32.mrf.mxu0
    %v317 = vadd.f32 %v218, %v316
    %v318 = vpop.f32.mrf.mxu0
    %319 = vdwg.mxu0
    %v321 = vrot.slane %v304, 7
    %v323 = vadd.f32 %v149, %v321
    %v324 = vxor.u32 %v323, 2147483648
    %v325 = vmul.f32 %v324, 1.442695
    %v326 = vpow.pop %v325
    %v327 = vadd.f32 %v326, 1.0
    %v328 = vrcp.pop %v327
    %v329 = vmul.f32 %v327, %v328
    %v330 = vsub.f32 1.0, %v329
    %v331 = vmul.f32 %v328, %v330
    %v332 = vadd.f32 %v328, %v331
    %vm333 = vweird.f32 %v327
    %vm334 = vweird.f32 %v328
    %vm335 = vmor %vm333, %vm334
    %v336 = vsel %vm335, %v328, %v332
    %v337 = vand.u32 2147483647, %v327
    %vm338 = vcmp.eq.f32.partialorder %v337, 8.507059e+37
    %v339 = vand.u32 %v327, 2147483648
    %v340 = vor.u32 1.1754944e-38, %v339
    %v341 = vsel %vm338, %v340, %v336
    %v342 = vmul.f32 1.0, %v341
    %v344 = vrot.slane %v317, 7
    %v346 = vmul.f32 %v342, %v344
    %v347 = vadd.f32 %v162, %v346
    %v348 = vtanh.pop %v347
    %v349 = vsub.f32 1.0, %v342
    %351 = vrot.lane.b32.xlu0 %v348, 64
    %v352 = vpop.permute.xlu0 %351
    %v354 = vmul.f32 %v349, %v352
    %v356 = vrot.slane %v286, 7
    %v358 = vmul.f32 %v342, %v356
    %v359 = vadd.f32 %v354, %v358
    %v360 = vpack.c.bf16 %v359, %v359
    %v362 = vshrl.u32 %v360, 16
    %364 = vrot.lane.b32.xlu0 %v362, 64
    %v365 = vpop.permute.xlu0 %364
    %v367 = vsel %vm221, %v365, 0
    %369 = vmatpush.bf16.msra.mxu0 0
    %370 = vmatpush.bf16.msra.mxu0 0
    %371 = vmatpush.bf16.msra.mxu0 0
    %372 = vmatpush.bf16.msra.mxu0 0
    %373 = vmatpush.bf16.msra.mxu0 %v206
    %374 = vmatpush.bf16.msra.mxu0 %v204
    %375 = vmatpush.bf16.msra.mxu0 %v202
    %376 = vmatpush.bf16.msra.mxu0 %v200
    %377 = vmatmul.bf16.gmra.mxu0 %v367
    %v378 = vpop.f32.mrf.mxu0
    %v379 = vadd.f32 %v217, %v378
    %v380 = vpop.f32.mrf.mxu0
    %381 = vdwg.mxu0
    %382 = vmatpush.bf16.msra.mxu0 0
    %383 = vmatpush.bf16.msra.mxu0 0
    %384 = vmatpush.bf16.msra.mxu0 0
    %385 = vmatpush.bf16.msra.mxu0 0
    %386 = vmatpush.bf16.msra.mxu0 %v207
    %387 = vmatpush.bf16.msra.mxu0 %v205
    %388 = vmatpush.bf16.msra.mxu0 %v203
    %389 = vmatpush.bf16.msra.mxu0 %v201
    %390 = vmatmul.bf16.gmra.mxu0 %v367
    %v391 = vpop.f32.mrf.mxu0
    %v392 = vadd.f32 %v218, %v391
    %v393 = vpop.f32.mrf.mxu0
    %394 = vdwg.mxu0
    %v396 = vrot.slane %v379, 6
    %v398 = vadd.f32 %v149, %v396
    %v399 = vxor.u32 %v398, 2147483648
    %v400 = vmul.f32 %v399, 1.442695
    %v401 = vpow.pop %v400
    %v402 = vadd.f32 %v401, 1.0
    %v403 = vrcp.pop %v402
    %v404 = vmul.f32 %v402, %v403
    %v405 = vsub.f32 1.0, %v404
    %v406 = vmul.f32 %v403, %v405
    %v407 = vadd.f32 %v403, %v406
    %vm408 = vweird.f32 %v402
    %vm409 = vweird.f32 %v403
    %vm410 = vmor %vm408, %vm409
    %v411 = vsel %vm410, %v403, %v407
    %v412 = vand.u32 2147483647, %v402
    %vm413 = vcmp.eq.f32.partialorder %v412, 8.507059e+37
    %v414 = vand.u32 %v402, 2147483648
    %v415 = vor.u32 1.1754944e-38, %v414
    %v416 = vsel %vm413, %v415, %v411
    %v417 = vmul.f32 1.0, %v416
    %v419 = vrot.slane %v392, 6
    %v421 = vmul.f32 %v417, %v419
    %v422 = vadd.f32 %v162, %v421
    %v423 = vtanh.pop %v422
    %v424 = vsub.f32 1.0, %v417
    %426 = vrot.lane.b32.xlu0 %v423, 64
    %v427 = vpop.permute.xlu0 %426
    %v429 = vmul.f32 %v424, %v427
    %v431 = vrot.slane %v359, 7
    %v433 = vmul.f32 %v417, %v431
    %v434 = vadd.f32 %v429, %v433
    %v435 = vpack.c.bf16 %v434, %v434
    %v437 = vrot.slane %v435, 1
    %438 = vrot.lane.b32.xlu0 %v437, 64
    %v439 = vpop.permute.xlu0 %438
    %v441 = vsel %vm221, %v439, 0
    %443 = vmatpush.bf16.msra.mxu0 0
    %444 = vmatpush.bf16.msra.mxu0 0
    %445 = vmatpush.bf16.msra.mxu0 0
    %446 = vmatpush.bf16.msra.mxu0 0
    %447 = vmatpush.bf16.msra.mxu0 %v206
    %448 = vmatpush.bf16.msra.mxu0 %v204
    %449 = vmatpush.bf16.msra.mxu0 %v202
    %450 = vmatpush.bf16.msra.mxu0 %v200
    %451 = vmatmul.bf16.gmra.mxu0 %v441
    %v452 = vpop.f32.mrf.mxu0
    %v453 = vadd.f32 %v217, %v452
    %v454 = vpop.f32.mrf.mxu0
    %455 = vdwg.mxu0
    %456 = vmatpush.bf16.msra.mxu0 0
    %457 = vmatpush.bf16.msra.mxu0 0
    %458 = vmatpush.bf16.msra.mxu0 0
    %459 = vmatpush.bf16.msra.mxu0 0
    %460 = vmatpush.bf16.msra.mxu0 %v207
    %461 = vmatpush.bf16.msra.mxu0 %v205
    %462 = vmatpush.bf16.msra.mxu0 %v203
    %463 = vmatpush.bf16.msra.mxu0 %v201
    %464 = vmatmul.bf16.gmra.mxu0 %v441
    %v465 = vpop.f32.mrf.mxu0
    %v466 = vadd.f32 %v218, %v465
    %v467 = vpop.f32.mrf.mxu0
    %468 = vdwg.mxu0
    %v470 = vrot.slane %v453, 5
    %v472 = vadd.f32 %v149, %v470
    %v473 = vxor.u32 %v472, 2147483648
    %v474 = vmul.f32 %v473, 1.442695
    %v475 = vpow.pop %v474
    %v476 = vadd.f32 %v475, 1.0
    %v477 = vrcp.pop %v476
    %v478 = vmul.f32 %v476, %v477
    %v479 = vsub.f32 1.0, %v478
    %v480 = vmul.f32 %v477, %v479
    %v481 = vadd.f32 %v477, %v480
    %vm482 = vweird.f32 %v476
    %vm483 = vweird.f32 %v477
    %vm484 = vmor %vm482, %vm483
    %v485 = vsel %vm484, %v477, %v481
    %v486 = vand.u32 2147483647, %v476
    %vm487 = vcmp.eq.f32.partialorder %v486, 8.507059e+37
    %v488 = vand.u32 %v476, 2147483648
    %v489 = vor.u32 1.1754944e-38, %v488
    %v490 = vsel %vm487, %v489, %v485
    %v491 = vmul.f32 1.0, %v490
    %v493 = vrot.slane %v466, 5
    %v495 = vmul.f32 %v491, %v493
    %v496 = vadd.f32 %v162, %v495
    %v497 = vtanh.pop %v496
    %v498 = vsub.f32 1.0, %v491
    %500 = vrot.lane.b32.xlu0 %v497, 64
    %v501 = vpop.permute.xlu0 %500
    %v503 = vmul.f32 %v498, %v501
    %v505 = vrot.slane %v434, 7
    %v507 = vmul.f32 %v491, %v505
    %v508 = vadd.f32 %v503, %v507
    %v509 = vpack.c.bf16 %v508, %v508
    %v511 = vshrl.u32 %v509, 16
    %v513 = vrot.slane %v511, 1
    %514 = vrot.lane.b32.xlu0 %v513, 64
    %v515 = vpop.permute.xlu0 %514
    %v517 = vsel %vm221, %v515, 0
    %519 = vmatpush.bf16.msra.mxu0 0
    %520 = vmatpush.bf16.msra.mxu0 0
    %521 = vmatpush.bf16.msra.mxu0 0
    %522 = vmatpush.bf16.msra.mxu0 0
    %523 = vmatpush.bf16.msra.mxu0 %v206
    %524 = vmatpush.bf16.msra.mxu0 %v204
    %525 = vmatpush.bf16.msra.mxu0 %v202
    %526 = vmatpush.bf16.msra.mxu0 %v200
    %527 = vmatmul.bf16.gmra.mxu0 %v517
    %v528 = vpop.f32.mrf.mxu0
    %v529 = vadd.f32 %v217, %v528
    %v530 = vpop.f32.mrf.mxu0
    %531 = vdwg.mxu0
    %532 = vmatpush.bf16.msra.mxu0 0
    %533 = vmatpush.bf16.msra.mxu0 0
    %534 = vmatpush.bf16.msra.mxu0 0
    %535 = vmatpush.bf16.msra.mxu0 0
    %536 = vmatpush.bf16.msra.mxu0 %v207
    %537 = vmatpush.bf16.msra.mxu0 %v205
    %538 = vmatpush.bf16.msra.mxu0 %v203
    %539 = vmatpush.bf16.msra.mxu0 %v201
    %540 = vmatmul.bf16.gmra.mxu0 %v517
    %v541 = vpop.f32.mrf.mxu0
    %v542 = vadd.f32 %v218, %v541
    %v543 = vpop.f32.mrf.mxu0
    %544 = vdwg.mxu0
    %v546 = vrot.slane %v529, 4
    %v548 = vadd.f32 %v149, %v546
    %v549 = vxor.u32 %v548, 2147483648
    %v550 = vmul.f32 %v549, 1.442695
    %v551 = vpow.pop %v550
    %v552 = vadd.f32 %v551, 1.0
    %v553 = vrcp.pop %v552
    %v554 = vmul.f32 %v552, %v553
    %v555 = vsub.f32 1.0, %v554
    %v556 = vmul.f32 %v553, %v555
    %v557 = vadd.f32 %v553, %v556
    %vm558 = vweird.f32 %v552
    %vm559 = vweird.f32 %v553
    %vm560 = vmor %vm558, %vm559
    %v561 = vsel %vm560, %v553, %v557
    %v562 = vand.u32 2147483647, %v552
    %vm563 = vcmp.eq.f32.partialorder %v562, 8.507059e+37
    %v564 = vand.u32 %v552, 2147483648
    %v565 = vor.u32 1.1754944e-38, %v564
    %v566 = vsel %vm563, %v565, %v561
    %v567 = vmul.f32 1.0, %v566
    %v569 = vrot.slane %v542, 4
    %v571 = vmul.f32 %v567, %v569
    %v572 = vadd.f32 %v162, %v571
    %v573 = vtanh.pop %v572
    %v574 = vsub.f32 1.0, %v567
    %576 = vrot.lane.b32.xlu0 %v573, 64
    %v577 = vpop.permute.xlu0 %576
    %v579 = vmul.f32 %v574, %v577
    %v581 = vrot.slane %v508, 7
    %v583 = vmul.f32 %v567, %v581
    %v584 = vadd.f32 %v579, %v583
    %v585 = vpack.c.bf16 %v584, %v584
    %v587 = vrot.slane %v585, 2
    %588 = vrot.lane.b32.xlu0 %v587, 64
    %v589 = vpop.permute.xlu0 %588
    %v591 = vsel %vm221, %v589, 0
    %593 = vmatpush.bf16.msra.mxu0 0
    %594 = vmatpush.bf16.msra.mxu0 0
    %595 = vmatpush.bf16.msra.mxu0 0
    %596 = vmatpush.bf16.msra.mxu0 0
    %597 = vmatpush.bf16.msra.mxu0 %v206
    %598 = vmatpush.bf16.msra.mxu0 %v204
    %599 = vmatpush.bf16.msra.mxu0 %v202
    %600 = vmatpush.bf16.msra.mxu0 %v200
    %601 = vmatmul.bf16.gmra.mxu0 %v591
    %v602 = vpop.f32.mrf.mxu0
    %v603 = vadd.f32 %v217, %v602
    %v604 = vpop.f32.mrf.mxu0
    %605 = vdwg.mxu0
    %606 = vmatpush.bf16.msra.mxu0 0
    %607 = vmatpush.bf16.msra.mxu0 0
    %608 = vmatpush.bf16.msra.mxu0 0
    %609 = vmatpush.bf16.msra.mxu0 0
    %610 = vmatpush.bf16.msra.mxu0 %v207
    %611 = vmatpush.bf16.msra.mxu0 %v205
    %612 = vmatpush.bf16.msra.mxu0 %v203
    %613 = vmatpush.bf16.msra.mxu0 %v201
    %614 = vmatmul.bf16.gmra.mxu0 %v591
    %v615 = vpop.f32.mrf.mxu0
    %v616 = vadd.f32 %v218, %v615
    %v617 = vpop.f32.mrf.mxu0
    %618 = vdwg.mxu0
    %v620 = vrot.slane %v603, 3
    %v622 = vadd.f32 %v149, %v620
    %v623 = vxor.u32 %v622, 2147483648
    %v624 = vmul.f32 %v623, 1.442695
    %v625 = vpow.pop %v624
    %v626 = vadd.f32 %v625, 1.0
    %v627 = vrcp.pop %v626
    %v628 = vmul.f32 %v626, %v627
    %v629 = vsub.f32 1.0, %v628
    %v630 = vmul.f32 %v627, %v629
    %v631 = vadd.f32 %v627, %v630
    %vm632 = vweird.f32 %v626
    %vm633 = vweird.f32 %v627
    %vm634 = vmor %vm632, %vm633
    %v635 = vsel %vm634, %v627, %v631
    %v636 = vand.u32 2147483647, %v626
    %vm637 = vcmp.eq.f32.partialorder %v636, 8.507059e+37
    %v638 = vand.u32 %v626, 2147483648
    %v639 = vor.u32 1.1754944e-38, %v638
    %v640 = vsel %vm637, %v639, %v635
    %v641 = vmul.f32 1.0, %v640
    %v643 = vrot.slane %v616, 3
    %v645 = vmul.f32 %v641, %v643
    %v646 = vadd.f32 %v162, %v645
    %v647 = vtanh.pop %v646
    %v648 = vsub.f32 1.0, %v641
    %650 = vrot.lane.b32.xlu0 %v647, 64
    %v651 = vpop.permute.xlu0 %650
    %v653 = vmul.f32 %v648, %v651
    %v655 = vrot.slane %v584, 7
    %v657 = vmul.f32 %v641, %v655
    %v658 = vadd.f32 %v653, %v657
    %v659 = vpack.c.bf16 %v658, %v658
    %v661 = vshrl.u32 %v659, 16
    %v663 = vrot.slane %v661, 2
    %664 = vrot.lane.b32.xlu0 %v663, 64
    %v665 = vpop.permute.xlu0 %664
    %v667 = vsel %vm221, %v665, 0
    %669 = vmatpush.bf16.msra.mxu0 0
    %670 = vmatpush.bf16.msra.mxu0 0
    %671 = vmatpush.bf16.msra.mxu0 0
    %672 = vmatpush.bf16.msra.mxu0 0
    %673 = vmatpush.bf16.msra.mxu0 %v206
    %674 = vmatpush.bf16.msra.mxu0 %v204
    %675 = vmatpush.bf16.msra.mxu0 %v202
    %676 = vmatpush.bf16.msra.mxu0 %v200
    %677 = vmatmul.bf16.gmra.mxu0 %v667
    %v678 = vpop.f32.mrf.mxu0
    %v679 = vadd.f32 %v217, %v678
    %v680 = vpop.f32.mrf.mxu0
    %681 = vdwg.mxu0
    %682 = vmatpush.bf16.msra.mxu0 0
    %683 = vmatpush.bf16.msra.mxu0 0
    %684 = vmatpush.bf16.msra.mxu0 0
    %685 = vmatpush.bf16.msra.mxu0 0
    %686 = vmatpush.bf16.msra.mxu0 %v207
    %687 = vmatpush.bf16.msra.mxu0 %v205
    %688 = vmatpush.bf16.msra.mxu0 %v203
    %689 = vmatpush.bf16.msra.mxu0 %v201
    %690 = vmatmul.bf16.gmra.mxu0 %v667
    %v691 = vpop.f32.mrf.mxu0
    %v692 = vadd.f32 %v218, %v691
    %v693 = vpop.f32.mrf.mxu0
    %694 = vdwg.mxu0
    %v696 = vrot.slane %v679, 2
    %v698 = vadd.f32 %v149, %v696
    %v699 = vxor.u32 %v698, 2147483648
    %v700 = vmul.f32 %v699, 1.442695
    %v701 = vpow.pop %v700
    %v702 = vadd.f32 %v701, 1.0
    %v703 = vrcp.pop %v702
    %v704 = vmul.f32 %v702, %v703
    %v705 = vsub.f32 1.0, %v704
    %v706 = vmul.f32 %v703, %v705
    %v707 = vadd.f32 %v703, %v706
    %vm708 = vweird.f32 %v702
    %vm709 = vweird.f32 %v703
    %vm710 = vmor %vm708, %vm709
    %v711 = vsel %vm710, %v703, %v707
    %v712 = vand.u32 2147483647, %v702
    %vm713 = vcmp.eq.f32.partialorder %v712, 8.507059e+37
    %v714 = vand.u32 %v702, 2147483648
    %v715 = vor.u32 1.1754944e-38, %v714
    %v716 = vsel %vm713, %v715, %v711
    %v717 = vmul.f32 1.0, %v716
    %v719 = vrot.slane %v692, 2
    %v721 = vmul.f32 %v717, %v719
    %v722 = vadd.f32 %v162, %v721
    %v723 = vtanh.pop %v722
    %v724 = vsub.f32 1.0, %v717
    %726 = vrot.lane.b32.xlu0 %v723, 64
    %v727 = vpop.permute.xlu0 %726
    %v729 = vmul.f32 %v724, %v727
    %v731 = vrot.slane %v658, 7
    %v733 = vmul.f32 %v717, %v731
    %v734 = vadd.f32 %v729, %v733
    %v735 = vpack.c.bf16 %v734, %v734
    %v737 = vrot.slane %v735, 3
    %738 = vrot.lane.b32.xlu0 %v737, 64
    %v739 = vpop.permute.xlu0 %738
    %v741 = vsel %vm221, %v739, 0
    %743 = vmatpush.bf16.msra.mxu0 0
    %744 = vmatpush.bf16.msra.mxu0 0
    %745 = vmatpush.bf16.msra.mxu0 0
    %746 = vmatpush.bf16.msra.mxu0 0
    %747 = vmatpush.bf16.msra.mxu0 %v206
    %748 = vmatpush.bf16.msra.mxu0 %v204
    %749 = vmatpush.bf16.msra.mxu0 %v202
    %750 = vmatpush.bf16.msra.mxu0 %v200
    %751 = vmatmul.bf16.gmra.mxu0 %v741
    %v752 = vpop.f32.mrf.mxu0
    %v753 = vadd.f32 %v217, %v752
    %v754 = vpop.f32.mrf.mxu0
    %755 = vdwg.mxu0
    %756 = vmatpush.bf16.msra.mxu0 0
    %757 = vmatpush.bf16.msra.mxu0 0
    %758 = vmatpush.bf16.msra.mxu0 0
    %759 = vmatpush.bf16.msra.mxu0 0
    %760 = vmatpush.bf16.msra.mxu0 %v207
    %761 = vmatpush.bf16.msra.mxu0 %v205
    %762 = vmatpush.bf16.msra.mxu0 %v203
    %763 = vmatpush.bf16.msra.mxu0 %v201
    %764 = vmatmul.bf16.gmra.mxu0 %v741
    %v765 = vpop.f32.mrf.mxu0
    %v766 = vadd.f32 %v218, %v765
    %v767 = vpop.f32.mrf.mxu0
    %768 = vdwg.mxu0
    %v770 = vrot.slane %v753, 1
    %v772 = vadd.f32 %v149, %v770
    %v773 = vxor.u32 %v772, 2147483648
    %v774 = vmul.f32 %v773, 1.442695
    %v775 = vpow.pop %v774
    %v776 = vadd.f32 %v775, 1.0
    %v777 = vrcp.pop %v776
    %v778 = vmul.f32 %v776, %v777
    %v779 = vsub.f32 1.0, %v778
    %v780 = vmul.f32 %v777, %v779
    %v781 = vadd.f32 %v777, %v780
    %vm782 = vweird.f32 %v776
    %vm783 = vweird.f32 %v777
    %vm784 = vmor %vm782, %vm783
    %v785 = vsel %vm784, %v777, %v781
    %v786 = vand.u32 2147483647, %v776
    %vm787 = vcmp.eq.f32.partialorder %v786, 8.507059e+37
    %v788 = vand.u32 %v776, 2147483648
    %v789 = vor.u32 1.1754944e-38, %v788
    %v790 = vsel %vm787, %v789, %v785
    %v791 = vmul.f32 1.0, %v790
    %v793 = vrot.slane %v766, 1
    %v795 = vmul.f32 %v791, %v793
    %v796 = vadd.f32 %v162, %v795
    %v797 = vtanh.pop %v796
    %v798 = vsub.f32 1.0, %v791
    %800 = vrot.lane.b32.xlu0 %v797, 64
    %v801 = vpop.permute.xlu0 %800
    %v803 = vmul.f32 %v798, %v801
    %v805 = vrot.slane %v734, 7
    %v807 = vmul.f32 %v791, %v805
    %v808 = vadd.f32 %v803, %v807
    %vm809 = vcmask 1040384
    %v810 = vsel %vm809, %v286, %v359
    %v811 = vsel %vm132, %v810, %v434
    %vm812 = vcmask 1042432
    %v813 = vsel %vm812, %v811, %v508
    %vm814 = vcmask 1043456
    %v815 = vsel %vm814, %v813, %v584
    %vm816 = vcmask 1044480
    %v817 = vsel %vm816, %v815, %v658
    %vm818 = vcmask 1045504
    %v819 = vsel %vm818, %v817, %v734
    %vm820 = vcmask 1046528
    %v821 = vsel %vm820, %v819, %v808
    %v823 = vrot.slane %v808, 7
    %v825 = vrot.slane %v734, 5
    %v827 = vrot.slane %v658, 3
    %v829 = vrot.slane %v584, 1
    %v831 = vrot.slane %v434, 5
    %v833 = vrot.slane %v359, 3
    %v835 = vrot.slane %v286, 1
    %v837 = vsel %vm809, %v823, %v825
    %v838 = vsel %vm132, %v837, %v827
    %v839 = vsel %vm812, %v838, %v829
    %v840 = vsel %vm814, %v839, %v581
    %v841 = vsel %vm816, %v840, %v831
    %v842 = vsel %vm818, %v841, %v833
    %v843 = vsel %vm820, %v842, %v835
    %845 = vrot.lane.b32.xlu0 %v821, 64
    %v846 = vpop.permute.xlu0 %845
    %849 = vrot.lane.b32.xlu0 %v843, 64
    %v850 = vpop.permute.xlu0 %849
    %vm852 = vcmask 261120
    %v853 = vsel %vm852, %v846, %v850
    %854 = vst.msk [vmem:[#allocation2] sm:$0xff] %vm221, %v853
    %855 = vrot.lane.b32.xlu0 %v808, 64
    %v856 = vpop.permute.xlu0 %855
    %858 = vrot.lane.b32.xlu0 %v835, 64
    %v859 = vpop.permute.xlu0 %858
    %v861 = vsel %vm852, %v856, %v859
    %vm862 = vcmask 523271
    %863 = vst.msk [vmem:[#allocation4 - $0x7] sm:$0x80] %vm862, %v861
    // Predicated region
    $region26: #{tpu_custom_call.1} parent=1 // pred_check
      _
    $region27: #{tpu_custom_call.1} parent=1 // pred_check_branch
      %865 = sbr.rel (0) target = $region29
    $region28: #{tpu_custom_call.1} parent=1 // pred_region
      %867 = vsyncadd [#allocation3], 0
      %s869 = sshll.u32 [#allocation2], 4
      %s870 = int_to_ptr.vmem [resolvable:$true] %s869
      %s871 = sshll.u32 %s6, 4
      %s872 = int_to_ptr.hbm [resolvable:$true] %s871
      %874 = dma.vmem_to_hbm [thread:$0]  %s870, 128, %s872, [#allocation3]
    $region29: #{tpu_custom_call.1} parent=1 // pred_fallthru
      _
    // Predicated region
    $region30: #{tpu_custom_call.1} parent=1 // pred_check
      _
    $region31: #{tpu_custom_call.1} parent=1 // pred_check_branch
      %876 = sbr.rel (0) target = $region33
    $region32: #{tpu_custom_call.1} parent=1 // pred_region
      %878 = vsyncadd [#allocation5], 0
      %s880 = sshll.u32 [#allocation4], 4
      %s881 = int_to_ptr.vmem [resolvable:$true] %s880
      %s882 = sshll.u32 %s7, 4
      %s883 = int_to_ptr.hbm [resolvable:$true] %s882
      %885 = dma.vmem_to_hbm [thread:$0]  %s881, 16, %s883, [#allocation5]
    $region33: #{tpu_custom_call.1} parent=1 // pred_fallthru
      _
    // Predicated region
    $region34: #{tpu_custom_call.1} parent=1 // pred_check
      _
    $region35: #{tpu_custom_call.1} parent=1 // pred_check_branch
      %887 = sbr.rel (0) target = $region37
    $region36: #{tpu_custom_call.1} parent=1 // pred_region
      %889 = dma.done [#allocation3], 128
    $region37: #{tpu_custom_call.1} parent=1 // pred_fallthru
      _
    // Predicated region
    $region38: #{tpu_custom_call.1} parent=1 // pred_check
      _
    $region39: #{tpu_custom_call.1} parent=1 // pred_check_branch
      %891 = sbr.rel (0) target = $region41
    $region40: #{tpu_custom_call.1} parent=1 // pred_region
      %893 = dma.done [#allocation5], 16
    $region41: #{tpu_custom_call.1} parent=1 // pred_fallthru
      _
    %894 = vsyncpa [#allocation3], 1
    %895 = vsyncpa [#allocation5], 1

</llo_original>
